<compile_context>
chip_gen: v7x
topology: tpu7x:2x2x1
jax: 0.10.0
libtpu: 0.0.40
codegen_flags: <defaults>
</compile_context>

<pallas_src>
import math

import jax
import jax.numpy as jnp
import numpy as np
from jax.experimental import pallas as pl
from jax.experimental.pallas import tpu as pltpu

DEFAULT_TM = 1024
DEFAULT_TN = 1024   # v6e (128 MiB VMEM) can push 2048; v5e gains nothing past 1024.


def _round_up(x, m):
    return ((x + m - 1) // m) * m


# --------------------------- kernels ----------------------------------------

def _make_hidden_kernel(eps: float):
    inv_sqrt2 = 1.0 / math.sqrt(2.0)

    def kernel(feat_ref, w1_ref, b1_ref, g_ref, beta_ref, h_ref):
        # bf16 x bf16 operands, f32 accumulation on the MXU.
        x = jnp.dot(feat_ref[...], w1_ref[...],
                    preferred_element_type=jnp.float32) + b1_ref[...]
        # exact erf-based gelu (matches transformers' `gelu`), f32 math
        x = x * 0.5 * (1.0 + jax.lax.erf(x * inv_sqrt2))
        mean = jnp.mean(x, axis=-1, keepdims=True)
        var = jnp.mean((x - mean) ** 2, axis=-1, keepdims=True)
        x = (x - mean) * jax.lax.rsqrt(var + eps)
        h_ref[...] = (x * g_ref[...] + beta_ref[...]).astype(h_ref.dtype)

    return kernel


def _decoder_kernel(h_ref, w2_ref, b2_ref, out_ref):
    out_ref[...] = (jnp.dot(h_ref[...], w2_ref[...],
                            preferred_element_type=jnp.float32)
                    + b2_ref[...]).astype(out_ref.dtype)


# --------------------------- wrapper -----------------------------------------

def prepare_roberta_lm_head_params(w1, b1, ln_g, ln_b, w2, dec_bias, *,
                                   tn=DEFAULT_TN):
    """One-time weight preparation (dtype cast + vocab padding).

    Call ONCE and reuse the returned dict across forward calls — this keeps
    the W2 pad + bf16 cast (an HBM-sized temp) out of the per-call hot path.
    """
    H = w1.shape[0]
    V = w2.shape[1]
    tn_eff = min(tn, _round_up(V, 128))
    V_pad = _round_up(V, tn_eff)
    w2_p = w2 if V_pad == V else jnp.pad(w2, ((0, 0), (0, V_pad - V)))
    db_p = dec_bias if V_pad == V else jnp.pad(dec_bias, ((0, V_pad - V),))
    return {
        "w1": w1.astype(jnp.bfloat16),
        "b1": b1.reshape(1, H).astype(jnp.float32),
        "gamma": ln_g.reshape(1, H).astype(jnp.float32),
        "beta": ln_b.reshape(1, H).astype(jnp.float32),
        # TODO(synk): on v7x, W2 could further be quantized to fp8 with a
        # per-column scale for 2x less decoder HBM traffic / 2x MXU rate.
        "w2": w2_p.astype(jnp.bfloat16),
        "b2": db_p.reshape(1, V_pad).astype(jnp.float32),
        "hidden_size": H,
        "vocab_size": V,
        "tn": tn_eff,
    }


def roberta_lm_head(features, params, *, eps=1e-12, tm=DEFAULT_TM,
                    out_dtype=jnp.bfloat16):
    """features: [T, H]. Returns logits [T, V] in `out_dtype`."""
    T, H = features.shape
    assert H == params["hidden_size"]
    V = params["vocab_size"]
    tn_eff = params["tn"]
    V_pad = params["w2"].shape[1]

    # ---- row tiling: (8,128)-aligned; enforce >=2 row tiles when possible so
    # v7x's second TensorCore gets work on the "parallel" row axis.
    tm_cap = _round_up(T, 8)
    tm_eff = min(tm, tm_cap)
    if tm_cap // tm_eff < 2 and tm_eff > 8:
        tm_eff = _round_up(max(tm_cap // 2, 8), 8)
    T_pad = _round_up(T, tm_eff)

    feat = features.astype(jnp.bfloat16)
    if T_pad != T:
        feat = jnp.pad(feat, ((0, T_pad - T), (0, 0)))

    # ---------------- pass 1: h = LayerNorm(gelu(feat @ W1 + b1)) ------------
    vmem1 = (2 * tm_eff * H * 2        # features tile (bf16, double-buffered)
             + 2 * H * H * 2           # W1 (bf16)
             + 3 * 2 * H * 4           # b1 / gamma / beta
             + 2 * tm_eff * H * 2)     # h output tile (bf16)
    cost1 = pl.CostEstimate(flops=2 * T_pad * H * H,
                            transcendentals=T_pad * H,
                            bytes_accessed=2 * T_pad * H * 2 + H * H * 2)

    h = pl.pallas_call(
        _make_hidden_kernel(eps),
        out_shape=jax.ShapeDtypeStruct((T_pad, H), jnp.bfloat16),
        grid_spec=pltpu.PrefetchScalarGridSpec(
            num_scalar_prefetch=0,
            grid=(T_pad // tm_eff,),
            in_specs=[
                pl.BlockSpec((tm_eff, H), lambda i: (i, 0)),   # features
                pl.BlockSpec((H, H), lambda i: (0, 0)),        # dense W
                pl.BlockSpec((1, H), lambda i: (0, 0)),        # dense b
                pl.BlockSpec((1, H), lambda i: (0, 0)),        # LN gamma
                pl.BlockSpec((1, H), lambda i: (0, 0)),        # LN beta
            ],
            out_specs=pl.BlockSpec((tm_eff, H), lambda i: (i, 0)),
        ),
        compiler_params=pltpu.CompilerParams(
            dimension_semantics=("parallel",),
            vmem_limit_bytes=int(min(vmem1 + (8 << 20), 96 << 20))),
        cost_estimate=cost1,
    )(feat, params["w1"], params["b1"], params["gamma"], params["beta"])

    # ---------------- pass 2: logits = h @ W2 + b2 (vocab axis outermost) ----
    out_bytes = jnp.dtype(out_dtype).itemsize
    vmem2 = (2 * tm_eff * H * 2                  # h tile (bf16)
             + 2 * H * tn_eff * 2                # W2 tile (bf16)
             + 2 * tn_eff * 4                    # decoder bias tile
             + 2 * tm_eff * tn_eff * out_bytes)  # output tile
    cost2 = pl.CostEstimate(
        flops=2 * T_pad * H * V_pad,
        transcendentals=0,
        bytes_accessed=((V_pad // tn_eff) * T_pad * H * 2   # h re-streamed
                        + H * V_pad * 2                     # W2 exactly once
                        + T_pad * V_pad * out_bytes))

    out = pl.pallas_call(
        _decoder_kernel,
        out_shape=jax.ShapeDtypeStruct((T_pad, V_pad), out_dtype),
        grid_spec=pltpu.PrefetchScalarGridSpec(
            num_scalar_prefetch=0,
            # Vocab axis OUTERMOST: the W2 block index is constant across the
            # inner row axis, so each (H, tn) W2 tile is DMA'd once and stays
            # VMEM-resident for all row tiles -> W2 streams from HBM once.
            grid=(V_pad // tn_eff, T_pad // tm_eff),
            in_specs=[
                pl.BlockSpec((tm_eff, H), lambda j, i: (i, 0)),    # h
                pl.BlockSpec((H, tn_eff), lambda j, i: (0, j)),    # decoder W
                pl.BlockSpec((1, tn_eff), lambda j, i: (0, j)),    # decoder b
            ],
            out_specs=pl.BlockSpec((tm_eff, tn_eff), lambda j, i: (i, j)),
        ),
        compiler_params=pltpu.CompilerParams(
            dimension_semantics=("parallel", "parallel"),
            # Derived from the actual tiles; defaults (~10-18 MiB) fit v7x's
            # 64 MiB VMEM.  Re-derive before copying larger v5e/v6e tile
            # configs (the double-buffered output tile grows fastest).
            vmem_limit_bytes=int(min(vmem2 + (8 << 20), 96 << 20))),
        cost_estimate=cost2,
    )(h, params["w2"], params["b2"])

    if T_pad != T or V_pad != V:
        out = out[:T, :V]
    return out


# --------------------------- reference + test --------------------------------

def _reference(features, w1, b1, ln_g, ln_b, w2, dec_bias, eps=1e-12):
    x = features @ w1 + b1
    x = x * 0.5 * (1.0 + jax.lax.erf(x / np.sqrt(2.0)))
    mean = jnp.mean(x, axis=-1, keepdims=True)
    var = jnp.mean((x - mean) ** 2, axis=-1, keepdims=True)
    x = (x - mean) / jnp.sqrt(var + eps)
    x = x * ln_g + ln_b
    return x @ w2 + dec_bias


if __name__ == "__main__":
    # Small shapes; vocab=200 deliberately not a multiple of 128 to exercise
    # the vocab-padding path (real RoBERTa vocab 50265 takes the same path).
    batch, seq, hidden, vocab = 2, 8, 32, 200
    eps = 1e-12

    key = jax.random.PRNGKey(0)
    k_feat, k_w1, k_b1, k_g, k_w2 = jax.random.split(key, 5)

    features = jax.random.normal(k_feat, (batch, seq, hidden), jnp.float32)

    # deterministic synthetic parameters (no checkpoint loading)
    w1 = jax.random.normal(k_w1, (hidden, hidden), jnp.float32) * 0.02
    b1 = jax.random.normal(k_b1, (hidden,), jnp.float32) * 0.02
    ln_g = 1.0 + 0.01 * jax.random.normal(k_g, (hidden,), jnp.float32)
    ln_b = jnp.zeros((hidden,), jnp.float32)
    w2 = jax.random.normal(k_w2, (hidden, vocab), jnp.float32) * 0.02
    dec_bias = jnp.zeros((vocab,), jnp.float32)

    # One-time weight prep (cache this in real usage).
    params = prepare_roberta_lm_head_params(w1, b1, ln_g, ln_b, w2, dec_bias)

    feat2d = features.reshape(batch * seq, hidden)

    out = roberta_lm_head(feat2d, params, eps=eps)   # bf16 logits by default
    out = jax.block_until_ready(out)

    ref = _reference(feat2d, w1, b1, ln_g, ln_b, w2, dec_bias, eps=eps)
    # bf16 h / W2 operands (f32 accumulation) + bf16 logits -> looser tolerance
    # than a pure-f32 path.
    np.testing.assert_allclose(np.asarray(out.astype(jnp.float32)),
                               np.asarray(ref), rtol=2e-2, atol=1e-2)

    logits = out.reshape(batch, seq, vocab)  # final shape matches PyTorch module
    assert logits.shape == (batch, seq, vocab)
    print("KERNEL_OK")
</pallas_src>

<mosaic_0001>
module attributes {stable_mosaic.version = 11 : i64} {
  func.func @kernel(%arg0: i32, %arg1: memref<8x32xbf16, #tpu.memory_space<vmem>>, %arg2: memref<32x32xbf16, #tpu.memory_space<vmem>>, %arg3: memref<1x32xf32, #tpu.memory_space<vmem>>, %arg4: memref<1x32xf32, #tpu.memory_space<vmem>>, %arg5: memref<1x32xf32, #tpu.memory_space<vmem>>, %arg6: memref<8x32xbf16, #tpu.memory_space<vmem>>) attributes {dimension_semantics = [#tpu.dimension_semantics<parallel>], iteration_bounds = array<i64: 2>, scalar_prefetch = 0 : i64, scratch_operands = 0 : i64, tpu.core_type = #tpu.core_type<tc>, window_params = [{transform_indices = @transform_0, window_bounds = array<i64: 8, 32>}, {pipeline_mode = #tpu.pipeline_mode<synchronous>, transform_indices = @transform_1, window_bounds = array<i64: 32, 32>}, {pipeline_mode = #tpu.pipeline_mode<synchronous>, transform_indices = @transform_2, window_bounds = array<i64: 1, 32>}, {pipeline_mode = #tpu.pipeline_mode<synchronous>, transform_indices = @transform_3, window_bounds = array<i64: 1, 32>}, {pipeline_mode = #tpu.pipeline_mode<synchronous>, transform_indices = @transform_4, window_bounds = array<i64: 1, 32>}, {transform_indices = @transform_5, window_bounds = array<i64: 8, 32>}]} {
    %c0 = arith.constant 0 : index
    %c0_0 = arith.constant 0 : index
    %0 = vector.load %arg1[%c0, %c0_0] : memref<8x32xbf16, #tpu.memory_space<vmem>>, vector<8x32xbf16>
    %c0_1 = arith.constant 0 : index
    %c0_2 = arith.constant 0 : index
    %1 = vector.load %arg2[%c0_1, %c0_2] : memref<32x32xbf16, #tpu.memory_space<vmem>>, vector<32x32xbf16>
    %cst = arith.constant dense<0.000000e+00> : vector<8x32xf32>
    %2 = tpu.matmul %0, %1, %cst {dimension_numbers = #tpu.dot_dimension_numbers<[1], [0], [0], [1], [0, 0, 1, 1], [], []>} : vector<8x32xbf16>, vector<32x32xbf16>, vector<8x32xf32> -> vector<8x32xf32>
    %c0_3 = arith.constant 0 : index
    %c0_4 = arith.constant 0 : index
    %3 = vector.load %arg3[%c0_3, %c0_4] : memref<1x32xf32, #tpu.memory_space<vmem>>, vector<1x32xf32>
    %4 = vector.broadcast %3 : vector<1x32xf32> to vector<8x32xf32>
    %5 = arith.addf %2, %4 : vector<8x32xf32>
    %cst_5 = arith.constant 5.000000e-01 : f32
    %6 = vector.broadcast %cst_5 : f32 to vector<8x32xf32>
    %7 = arith.mulf %5, %6 : vector<8x32xf32>
    %cst_6 = arith.constant 0.707106769 : f32
    %8 = vector.broadcast %cst_6 : f32 to vector<8x32xf32>
    %9 = arith.mulf %5, %8 : vector<8x32xf32>
    %10 = math.erf %9 : vector<8x32xf32>
    %cst_7 = arith.constant 1.000000e+00 : f32
    %11 = vector.broadcast %cst_7 : f32 to vector<8x32xf32>
    %12 = arith.addf %11, %10 : vector<8x32xf32>
    %13 = arith.mulf %7, %12 : vector<8x32xf32>
    %cst_8 = arith.constant dense<0.000000e+00> : vector<8xf32>
    %14 = vector.multi_reduction <add>, %13, %cst_8 [1] : vector<8x32xf32> to vector<8xf32>
    %15 = vector.shape_cast %14 : vector<8xf32> to vector<8x1xf32>
    %cst_9 = arith.constant 3.200000e+01 : f32
    %16 = vector.broadcast %cst_9 : f32 to vector<8x1xf32>
    %17 = arith.divf %15, %16 : vector<8x1xf32>
    %18 = vector.broadcast %17 : vector<8x1xf32> to vector<8x32xf32>
    %19 = arith.subf %13, %18 : vector<8x32xf32>
    %20 = arith.mulf %19, %19 : vector<8x32xf32>
    %cst_10 = arith.constant dense<0.000000e+00> : vector<8xf32>
    %21 = vector.multi_reduction <add>, %20, %cst_10 [1] : vector<8x32xf32> to vector<8xf32>
    %22 = vector.shape_cast %21 : vector<8xf32> to vector<8x1xf32>
    %cst_11 = arith.constant 3.200000e+01 : f32
    %23 = vector.broadcast %cst_11 : f32 to vector<8x1xf32>
    %24 = arith.divf %22, %23 : vector<8x1xf32>
    %25 = vector.broadcast %17 : vector<8x1xf32> to vector<8x32xf32>
    %26 = arith.subf %13, %25 : vector<8x32xf32>
    %cst_12 = arith.constant 9.99999996E-13 : f32
    %27 = vector.broadcast %cst_12 : f32 to vector<8x1xf32>
    %28 = arith.addf %24, %27 : vector<8x1xf32>
    %29 = math.rsqrt %28 : vector<8x1xf32>
    %30 = vector.broadcast %29 : vector<8x1xf32> to vector<8x32xf32>
    %31 = arith.mulf %26, %30 : vector<8x32xf32>
    %c0_13 = arith.constant 0 : index
    %c0_14 = arith.constant 0 : index
    %32 = vector.load %arg4[%c0_13, %c0_14] : memref<1x32xf32, #tpu.memory_space<vmem>>, vector<1x32xf32>
    %33 = vector.broadcast %32 : vector<1x32xf32> to vector<8x32xf32>
    %34 = arith.mulf %31, %33 : vector<8x32xf32>
    %c0_15 = arith.constant 0 : index
    %c0_16 = arith.constant 0 : index
    %35 = vector.load %arg5[%c0_15, %c0_16] : memref<1x32xf32, #tpu.memory_space<vmem>>, vector<1x32xf32>
    %36 = vector.broadcast %35 : vector<1x32xf32> to vector<8x32xf32>
    %37 = arith.addf %34, %36 : vector<8x32xf32>
    %38 = arith.truncf %37 : vector<8x32xf32> to vector<8x32xbf16>
    %c0_17 = arith.constant 0 : index
    %c0_18 = arith.constant 0 : index
    %39 = vector.load %arg6[%c0_17, %c0_18] : memref<8x32xbf16, #tpu.memory_space<vmem>>, vector<8x32xbf16>
    tpu.vector_store %arg6[%c0_17, %c0_18], %38 {strides = array<i32>} : memref<8x32xbf16, #tpu.memory_space<vmem>>, vector<8x32xbf16>,
    return
  }
  func.func @transform_0(%arg0: i32) -> (i32, i32) {
    %c0_i32 = arith.constant 0 : i32
    %c0_i32_0 = arith.constant 0 : i32
    return %arg0, %c0_i32 : i32, i32
  }
  func.func @transform_1(%arg0: i32) -> (i32, i32) {
    %c0_i32 = arith.constant 0 : i32
    %c0_i32_0 = arith.constant 0 : i32
    %c0_i32_1 = arith.constant 0 : i32
    return %c0_i32, %c0_i32_0 : i32, i32
  }
  func.func @transform_2(%arg0: i32) -> (i32, i32) {
    %c0_i32 = arith.constant 0 : i32
    %c0_i32_0 = arith.constant 0 : i32
    %c0_i32_1 = arith.constant 0 : i32
    return %c0_i32, %c0_i32_0 : i32, i32
  }
  func.func @transform_3(%arg0: i32) -> (i32, i32) {
    %c0_i32 = arith.constant 0 : i32
    %c0_i32_0 = arith.constant 0 : i32
    %c0_i32_1 = arith.constant 0 : i32
    return %c0_i32, %c0_i32_0 : i32, i32
  }
  func.func @transform_4(%arg0: i32) -> (i32, i32) {
    %c0_i32 = arith.constant 0 : i32
    %c0_i32_0 = arith.constant 0 : i32
    %c0_i32_1 = arith.constant 0 : i32
    return %c0_i32, %c0_i32_0 : i32, i32
  }
  func.func @transform_5(%arg0: i32) -> (i32, i32) {
    %c0_i32 = arith.constant 0 : i32
    %c0_i32_0 = arith.constant 0 : i32
    return %arg0, %c0_i32 : i32, i32
  }
}

</mosaic_0001>

<llo_original>
// kernel: tpu_custom_call.1
$region0: #{tpu_custom_call.1}
  #allocation0 [shape = 'u32[]', space=smem, size = 0x4, offset = 0x4, fixed_abs, tag = 'smem constant byte address 0x4 - core index']
  #allocation1 [shape = 'u32[144,128]{1,0:T(1,128)}', space=vmem, size = 0x12000, scoped, tag = 'internal scratch']
  %s0 = inlined_call_operand.hbm [shape: bf16[16,32], index: 0, kind: input, shape index: {}]
  %s1 = inlined_call_operand.hbm [shape: bf16[32,32], index: 1, kind: input, shape index: {}]
  %s2 = inlined_call_operand.vmem [shape: f32[1,32], index: 2, kind: input, shape index: {}]
  %s3 = inlined_call_operand.vmem [shape: f32[1,32], index: 3, kind: input, shape index: {}]
  %s4 = inlined_call_operand.vmem [shape: f32[1,32], index: 4, kind: input, shape index: {}]
  %s5 = inlined_call_operand.hbm [shape: bf16[16,32], index: 5, kind: output, shape index: {}]
  %s6 = sld [smem:[#allocation0]]
  $region61: #{tpu_custom_call.1} parent=0
    _
  %s8 = ssub.s32 1, %s6
  %s9 = scalar_select 0, %s8, %s6
  $region1: #{tpu_custom_call.1} parent=0
    #allocation2 [shape = 'u8[4096]{0}', space=vmem, size = 0x1000, scoped, tag = 'input window, operand 0']
    #allocation3 [shape = 's32[2]{0}', space=sflag, size = 0x8, scoped, tag = 'scoped memory for tpu_custom_call.1']
    #allocation4 [shape = 's32[2]{0}', space=sflag, size = 0x8, scoped, tag = 'scoped memory for tpu_custom_call.1']
    #allocation5 [shape = 'u8[8192]{0}', space=vmem, size = 0x2000, scoped, tag = 'input window, operand 1, single buffered']
    #allocation6 [shape = 's32[1]{0}', space=sflag, size = 0x4, scoped, tag = 'scoped memory for tpu_custom_call.1']
    #allocation7 [shape = 'u8[4096]{0}', space=vmem, size = 0x1000, scoped, tag = 'output window, operand 0']
    %10 = vsyncpa [#allocation3], 0
    %s11 = scalar_lea.sflag [#allocation3], 1
    %12 = vsyncpa %s11, 0
    %13 = vsyncpa [#allocation6], 0
    %14 = vsyncpa [#allocation4], 0
    %s15 = scalar_lea.sflag [#allocation4], 1
    %16 = vsyncpa %s15, 0
    loop: start=0, step=1, limit=4
    $region2: #{tpu_custom_call.1} parent=1 // loop_pre_header
      _
    $region3: #{tpu_custom_call.1} parent=1 // loop_header
      %s18 = sphi 0, %s22
      %p19 = scmp.ge.s32.totalorder %s18, 4
      %s28 = sphi 0, %s30
      %s31 = sphi 0, %s28
      %s32 = sphi 0, %s31
      %s48 = sphi 0, %s32
      %s52 = sphi 0, %s52
      %s54 = sphi 0, %s52
      %s55 = sphi 0, %s54
      %s69 = sphi 0, %s55
      %s73 = sphi 0, %s73
      %s75 = sphi 0, %s73
      %s76 = sphi 0, %s75
      %s90 = sphi 0, %s76
      %s94 = sphi 0, %s94
      %s96 = sphi 0, %s94
      %s97 = sphi 0, %s96
      %s111 = sphi 0, %s97
      %s115 = sphi 0, %s115
      %s117 = sphi 0, %s115
      %s118 = sphi 0, %s117
      %s132 = sphi 0, %s118
      %s138 = sphi 0, %s140
      %s141 = sphi 0, %s138
      %s142 = sphi 0, %s141
      %s158 = sphi 0, %s142
    $region4: #{tpu_custom_call.1} parent=1 // loop_header_branch
      %21 = sbr.rel (%p19) target = $region8
    $region5: #{tpu_custom_call.1} parent=1 // loop_body
      %s23 = ssub.s32 %s18, 1
      %s24 = ssub.s32 %s18, 2
      %s25 = sadd.s32 %s18, 1
      %s26 = ssub.s32 %s18, %s25
      %p27 = scmp.eq.s32.totalorder %s26, 0
      %s29 = sadd.s32 %s28, 1
      %s30 = scalar_select %p27, %s28, %s29
      %p33 = pneg %p27
      %p34 = scmp.eq.s32.totalorder %s18, 1
      %p35 = por %p33, %p34
      %p36 = scmp.ne.s32.totalorder %s28, %s31
      %p37 = scmp.eq.s32.totalorder %s18, 0
      %p38 = por %p36, %p37
      %p39 = scmp.ne.s32.totalorder %s28, %s31
      %p40 = scmp.eq.s32.totalorder %s23, 1
      %p41 = por %p39, %p40
      %p42 = scmp.ne.s32.totalorder %s31, %s32
      %p43 = scmp.eq.s32.totalorder %s23, 0
      %p44 = por %p42, %p43
      %p45 = scmp.ne.s32.totalorder %s31, %s32
      %p46 = scmp.eq.s32.totalorder %s24, 1
      %p47 = por %p45, %p46
      %p49 = scmp.ne.s32.totalorder %s32, %s48
      %p50 = scmp.eq.s32.totalorder %s24, 0
      %p51 = por %p49, %p50
      %s53 = sadd.s32 %s52, 1
      %p56 = scmp.eq.s32.totalorder %s18, 1
      %p57 = scmp.ne.s32.totalorder %s52, %s54
      %p58 = scmp.eq.s32.totalorder %s18, 0
      %p59 = por %p57, %p58
      %p60 = scmp.ne.s32.totalorder %s52, %s54
      %p61 = scmp.eq.s32.totalorder %s23, 1
      %p62 = por %p60, %p61
      %p63 = scmp.ne.s32.totalorder %s54, %s55
      %p64 = scmp.eq.s32.totalorder %s23, 0
      %p65 = por %p63, %p64
      %p66 = scmp.ne.s32.totalorder %s54, %s55
      %p67 = scmp.eq.s32.totalorder %s24, 1
      %p68 = por %p66, %p67
      %p70 = scmp.ne.s32.totalorder %s55, %s69
      %p71 = scmp.eq.s32.totalorder %s24, 0
      %p72 = por %p70, %p71
      %s74 = sadd.s32 %s73, 1
      %p77 = scmp.eq.s32.totalorder %s18, 1
      %p78 = scmp.ne.s32.totalorder %s73, %s75
      %p79 = scmp.eq.s32.totalorder %s18, 0
      %p80 = por %p78, %p79
      %p81 = scmp.ne.s32.totalorder %s73, %s75
      %p82 = scmp.eq.s32.totalorder %s23, 1
      %p83 = por %p81, %p82
      %p84 = scmp.ne.s32.totalorder %s75, %s76
      %p85 = scmp.eq.s32.totalorder %s23, 0
      %p86 = por %p84, %p85
      %p87 = scmp.ne.s32.totalorder %s75, %s76
      %p88 = scmp.eq.s32.totalorder %s24, 1
      %p89 = por %p87, %p88
      %p91 = scmp.ne.s32.totalorder %s76, %s90
      %p92 = scmp.eq.s32.totalorder %s24, 0
      %p93 = por %p91, %p92
      %s95 = sadd.s32 %s94, 1
      %p98 = scmp.eq.s32.totalorder %s18, 1
      %p99 = scmp.ne.s32.totalorder %s94, %s96
      %p100 = scmp.eq.s32.totalorder %s18, 0
      %p101 = por %p99, %p100
      %p102 = scmp.ne.s32.totalorder %s94, %s96
      %p103 = scmp.eq.s32.totalorder %s23, 1
      %p104 = por %p102, %p103
      %p105 = scmp.ne.s32.totalorder %s96, %s97
      %p106 = scmp.eq.s32.totalorder %s23, 0
      %p107 = por %p105, %p106
      %p108 = scmp.ne.s32.totalorder %s96, %s97
      %p109 = scmp.eq.s32.totalorder %s24, 1
      %p110 = por %p108, %p109
      %p112 = scmp.ne.s32.totalorder %s97, %s111
      %p113 = scmp.eq.s32.totalorder %s24, 0
      %p114 = por %p112, %p113
      %s116 = sadd.s32 %s115, 1
      %p119 = scmp.eq.s32.totalorder %s18, 1
      %p120 = scmp.ne.s32.totalorder %s115, %s117
      %p121 = scmp.eq.s32.totalorder %s18, 0
      %p122 = por %p120, %p121
      %p123 = scmp.ne.s32.totalorder %s115, %s117
      %p124 = scmp.eq.s32.totalorder %s23, 1
      %p125 = por %p123, %p124
      %p126 = scmp.ne.s32.totalorder %s117, %s118
      %p127 = scmp.eq.s32.totalorder %s23, 0
      %p128 = por %p126, %p127
      %p129 = scmp.ne.s32.totalorder %s117, %s118
      %p130 = scmp.eq.s32.totalorder %s24, 1
      %p131 = por %p129, %p130
      %p133 = scmp.ne.s32.totalorder %s118, %s132
      %p134 = scmp.eq.s32.totalorder %s24, 0
      %p135 = por %p133, %p134
      %s136 = ssub.s32 %s18, %s25
      %p137 = scmp.eq.s32.totalorder %s136, 0
      %s139 = sadd.s32 %s138, 1
      %s140 = scalar_select %p137, %s138, %s139
      %p143 = pneg %p137
      %p144 = scmp.eq.s32.totalorder %s18, 1
      %p145 = por %p143, %p144
      %p146 = scmp.ne.s32.totalorder %s138, %s141
      %p147 = scmp.eq.s32.totalorder %s18, 0
      %p148 = por %p146, %p147
      %p149 = scmp.ne.s32.totalorder %s138, %s141
      %p150 = scmp.eq.s32.totalorder %s23, 1
      %p151 = por %p149, %p150
      %p152 = scmp.ne.s32.totalorder %s141, %s142
      %p153 = scmp.eq.s32.totalorder %s23, 0
      %p154 = por %p152, %p153
      %p155 = scmp.ne.s32.totalorder %s141, %s142
      %p156 = scmp.eq.s32.totalorder %s24, 1
      %p157 = por %p155, %p156
      %p159 = scmp.ne.s32.totalorder %s142, %s158
      %p160 = scmp.eq.s32.totalorder %s24, 0
      %p161 = por %p159, %p160
      %p162 = scmp.le.s32.totalorder 1, %s18
      %p163 = scmp.lt.s32.totalorder %s18, 3
      %p164 = pnand %p162, %p163
      %p165 = pneg %p164
      // Predicated region
      $region9: #{tpu_custom_call.1} parent=5 // pred_check
        _
      $region10: #{tpu_custom_call.1} parent=5 // pred_check_branch
        %167 = sbr.rel (%p164) target = $region12
      $region11: #{tpu_custom_call.1} parent=5 // pred_region
        %s168 = ssub.s32 %s18, 1
        // Predicated region
        $region13: #{tpu_custom_call.1} parent=11 // pred_check
          %p169 = pneg %p65
        $region14: #{tpu_custom_call.1} parent=11 // pred_check_branch
          %171 = sbr.rel (%p169) target = $region16
        $region15: #{tpu_custom_call.1} parent=11 // pred_region
          %s173 = ssub.s32 256, 256
          %174 = vsyncadd [#allocation6], %s173
          %s175 = sshll.u32 [#allocation5], 4
          %s176 = int_to_ptr.vmem [resolvable:$true] %s175
          %181 = dma.hbm_to_vmem [thread:$0]  %s1, 256, %s176, [#allocation6], 64, 64, 4
        $region16: #{tpu_custom_call.1} parent=11 // pred_fallthru
          _
        // Predicated region
        $region17: #{tpu_custom_call.1} parent=11 // pred_check
          %p182 = pneg %p86
        $region18: #{tpu_custom_call.1} parent=11 // pred_check_branch
          %184 = sbr.rel (%p182) target = $region20
        $region19: #{tpu_custom_call.1} parent=11 // pred_region
          _
        $region20: #{tpu_custom_call.1} parent=11 // pred_fallthru
          _
        // Predicated region
        $region21: #{tpu_custom_call.1} parent=11 // pred_check
          %p185 = pneg %p107
        $region22: #{tpu_custom_call.1} parent=11 // pred_check_branch
          %187 = sbr.rel (%p185) target = $region24
        $region23: #{tpu_custom_call.1} parent=11 // pred_region
          _
        $region24: #{tpu_custom_call.1} parent=11 // pred_fallthru
          _
        // Predicated region
        $region25: #{tpu_custom_call.1} parent=11 // pred_check
          %p188 = pneg %p128
        $region26: #{tpu_custom_call.1} parent=11 // pred_check_branch
          %190 = sbr.rel (%p188) target = $region28
        $region27: #{tpu_custom_call.1} parent=11 // pred_region
          _
        $region28: #{tpu_custom_call.1} parent=11 // pred_fallthru
          _
      $region12: #{tpu_custom_call.1} parent=5 // pred_fallthru
        _
      %p191 = scmp.lt.s32.totalorder %s18, 2
      // Predicated region
      $region29: #{tpu_custom_call.1} parent=5 // pred_check
        %p192 = pneg %p191
      $region30: #{tpu_custom_call.1} parent=5 // pred_check_branch
        %194 = sbr.rel (%p192) target = $region32
      $region31: #{tpu_custom_call.1} parent=5 // pred_region
        // Predicated region
        $region33: #{tpu_custom_call.1} parent=31 // pred_check
          %p195 = pneg %p38
        $region34: #{tpu_custom_call.1} parent=31 // pred_check_branch
          %197 = sbr.rel (%p195) target = $region36
        $region35: #{tpu_custom_call.1} parent=31 // pred_region
          %s198 = sand.u32 %s28, 1
          %s199 = scalar_lea.sflag [#allocation3], %s198
          %s200 = sand.u32 %s28, 1
          %s201 = smul.addr %s200, 4
          %s202 = scalar_lea.vmem [#allocation2], %s201
          %s204 = ssub.s32 64, 64
          %205 = vsyncadd %s199, %s204
          %s206 = smul.addr %s18, 64
          %s207 = scalar_lea.hbm %s0, %s206
          %s209 = sshll.u32 %s202, 4
          %s210 = int_to_ptr.vmem [resolvable:$true] %s209
          %212 = dma.hbm_to_vmem [thread:$0]  %s207, 64, %s210, %s199
        $region36: #{tpu_custom_call.1} parent=31 // pred_fallthru
          _
      $region32: #{tpu_custom_call.1} parent=5 // pred_fallthru
        _
      %p213 = scmp.le.s32.totalorder 1, %s18
      %p214 = scmp.lt.s32.totalorder %s18, 3
      %p215 = pnand %p213, %p214
      %p216 = pneg %p215
      // Predicated region
      $region37: #{tpu_custom_call.1} parent=5 // pred_check
        _
      $region38: #{tpu_custom_call.1} parent=5 // pred_check_branch
        %218 = sbr.rel (%p215) target = $region40
      $region39: #{tpu_custom_call.1} parent=5 // pred_region
        %s219 = ssub.s32 %s18, 1
        %s220 = sand.u32 %s31, 1
        %s221 = scalar_lea.sflag [#allocation3], %s220
        %s222 = sand.u32 %s31, 1
        %s223 = smul.addr %s222, 4
        %s224 = scalar_lea.vmem [#allocation2], %s223
        // Predicated region
        $region41: #{tpu_custom_call.1} parent=39 // pred_check
          %p225 = pneg %p44
        $region42: #{tpu_custom_call.1} parent=39 // pred_check_branch
          %227 = sbr.rel (%p225) target = $region44
        $region43: #{tpu_custom_call.1} parent=39 // pred_region
          %228 = dma.done %s221, 64
        $region44: #{tpu_custom_call.1} parent=39 // pred_fallthru
          _
        // Predicated region
        $region45: #{tpu_custom_call.1} parent=39 // pred_check
          %p229 = pneg %p65
        $region46: #{tpu_custom_call.1} parent=39 // pred_check_branch
          %231 = sbr.rel (%p229) target = $region48
        $region47: #{tpu_custom_call.1} parent=39 // pred_region
          %232 = dma.done [#allocation6], 256
        $region48: #{tpu_custom_call.1} parent=39 // pred_fallthru
          _
        %s233 = sand.u32 %s31, 1
        %s234 = scalar_lea.sflag [#allocation3], %s233
        %s235 = sand.u32 %s31, 1
        %s236 = smul.addr %s235, 4
        %s237 = scalar_lea.vmem [#allocation2], %s236
        %p238 = pneg %p44
        %p239 = pneg %p41
        %p240 = pneg %p65
        %p241 = pneg %p62
        %p242 = pneg %p86
        %p243 = pneg %p83
        %p244 = pneg %p107
        %p245 = pneg %p104
        %p246 = pneg %p128
        %p247 = pneg %p125
        %p248 = pneg %p154
        %p249 = pneg %p151
        %s250 = sand.u32 %s141, 1
        %s251 = scalar_lea.sflag [#allocation4], %s250
        %s252 = sand.u32 %s141, 1
        %s253 = smul.addr %s252, 4
        %s254 = scalar_lea.vmem [#allocation7], %s253
        %v256 = vld [vmem:[%s224] sm:$0xf]
        %v257 = vld [vmem:[#allocation5] sm:$0xf]
        %v258 = vld [vmem:[#allocation5 + $0x4] sm:$0xf]
        %v259 = vld [vmem:[#allocation5 + $0x8] sm:$0xf]
        %v260 = vld [vmem:[#allocation5 + $0xc] sm:$0xf]
        %v261 = vld [vmem:[%s2] sm:$0x1]
        %v263 = vlaneseq
        %v264 = vshrl.u32 %v263, 7
        %v265 = vsub.s32 0, %v264
        %v266 = vrot.slane %v261, %v265
        %v272 = vunpack.c.l.b16 %v257
        %v273 = vunpack.c.l.b16 %v258
        %v274 = vunpack.c.l.b16 %v259
        %v275 = vunpack.c.l.b16 %v260
        %v276 = vpack.c.b16 %v273, %v272
        %v277 = vpack.c.b16 %v275, %v274
        %vm280 = vcmask 261120
        %v282 = vsel %vm280, %v256, 0
        %284 = vmatprep.subr.bf16.mxu0 0
        %285 = vmatpush1.bf16.msra.mxu0 %v276
        %286 = vmatprep.subr.bf16.mxu0 0
        %287 = vmatpush1.bf16.msra.mxu0 %v277
        %288 = vmatprep.subr.bf16.mxu0 0
        %289 = vmatpush1.bf16.msra.mxu0 0
        %290 = vmatprep.subr.bf16.mxu0 0
        %291 = vmatpush1.bf16.msra.mxu0 0
        %292 = vmatprep.subr.bf16.mxu0 0
        %293 = vmatpush1.bf16.msra.mxu0 0
        %294 = vmatprep.subr.bf16.mxu0 0
        %295 = vmatpush1.bf16.msra.mxu0 0
        %296 = vmatprep.subr.bf16.mxu0 0
        %297 = vmatpush1.bf16.msra.mxu0 0
        %298 = vmatprep.subr.bf16.mxu0 0
        %299 = vmatpush1.bf16.msra.mxu0 0
        %300 = vmatprep.subr.bf16.mxu0 0
        %301 = vmatpush1.bf16.msra.mxu0 0
        %302 = vmatprep.subr.bf16.mxu0 0
        %303 = vmatpush1.bf16.msra.mxu0 0
        %304 = vmatprep.subr.bf16.mxu0 0
        %305 = vmatpush1.bf16.msra.mxu0 0
        %306 = vmatprep.subr.bf16.mxu0 0
        %307 = vmatpush1.bf16.msra.mxu0 0
        %308 = vmatprep.subr.bf16.mxu0 0
        %309 = vmatpush1.bf16.msra.mxu0 0
        %310 = vmatprep.subr.bf16.mxu0 0
        %311 = vmatpush1.bf16.msra.mxu0 0
        %312 = vmatprep.subr.bf16.mxu0 0
        %313 = vmatpush1.bf16.msra.mxu0 0
        %314 = vmatprep.subr.bf16.mxu0 0
        %315 = vmatpush1.bf16.msra.mxu0 0
        %316 = vmatprep.mubr.bf16.mxu0 0
        %317 = vmatmul.mubr.bf16.gmra.mrb[0].mxu0 %v282
        %v318 = vpop.f32.mrb[0].mxu0
        %v319 = vadd.f32 %v266, %v318
        %v320 = vpop.f32.mrb[0].mxu0
        %v321 = vpop.f32.mrb[0].mxu0
        %v322 = vpop.f32.mrb[0].mxu0
        %323 = vdwg.mxu0
        %v324 = vmul.f32 %v319, 0.5
        %v325 = vmul.f32 %v319, 0.70710677
        %v326 = verf.f32.pop %v325
        %v327 = vadd.f32 %v326, 1.0
        %v328 = vmul.f32 %v324, %v327
        %v329 = vsel %vm280, %v328, 0.0
        %330 = vadd.xlane.f32.xlu0 %v329
        %v331 = vpop.xlane.xlu0 %330
        %v332 = vrcp.pop 32.0
        %v333 = vmul.f32 %v331, %v332
        %v334 = vsub.f32 %v328, %v333
        %v335 = vmul.f32 %v334, %v334
        %v336 = vsel %vm280, %v335, 0.0
        %337 = vadd.xlane.f32.xlu0 %v336
        %v338 = vpop.xlane.xlu0 %337
        %v339 = vmul.f32 %v338, %v332
        %v340 = vadd.f32 %v339, 1e-12
        %v341 = vrsqrt.pop %v340
        %v342 = vmul.f32 %v334, %v341
        %v343 = vld [vmem:[%s3] sm:$0x1]
        %v345 = vlaneseq
        %v346 = vshrl.u32 %v345, 7
        %v347 = vsub.s32 0, %v346
        %v348 = vrot.slane %v343, %v347
        %v350 = vmul.f32 %v342, %v348
        %v351 = vld [vmem:[%s4] sm:$0x1]
        %v353 = vlaneseq
        %v354 = vshrl.u32 %v353, 7
        %v355 = vsub.s32 0, %v354
        %v356 = vrot.slane %v351, %v355
        %v358 = vadd.f32 %v350, %v356
        %v359 = vpack.c.bf16 %v358, %v358
        %vm360 = vcmask 257024
        %361 = vst.msk [vmem:[%s254] sm:$0xf] %vm360, %v359
        %s362 = sand.u32 %s141, 1
        %s363 = scalar_lea.sflag [#allocation4], %s362
        %s364 = sand.u32 %s141, 1
        %s365 = smul.addr %s364, 4
        %s366 = scalar_lea.vmem [#allocation7], %s365
        // Predicated region
        $region49: #{tpu_custom_call.1} parent=39 // pred_check
          %p367 = pneg %p151
        $region50: #{tpu_custom_call.1} parent=39 // pred_check_branch
          %369 = sbr.rel (%p367) target = $region52
        $region51: #{tpu_custom_call.1} parent=39 // pred_region
          %s371 = ssub.s32 64, 64
          %372 = vsyncadd %s363, %s371
          %s373 = smul.addr %s23, 64
          %s374 = scalar_lea.hbm %s5, %s373
          %s376 = sshll.u32 %s366, 4
          %s377 = int_to_ptr.vmem [resolvable:$true] %s376
          %379 = dma.vmem_to_hbm [thread:$0]  %s377, 64, %s374, %s363
        $region52: #{tpu_custom_call.1} parent=39 // pred_fallthru
          _
      $region40: #{tpu_custom_call.1} parent=5 // pred_fallthru
        _
      %p380 = scmp.le.s32.totalorder 2, %s18
      // Predicated region
      $region53: #{tpu_custom_call.1} parent=5 // pred_check
        %p381 = pneg %p380
      $region54: #{tpu_custom_call.1} parent=5 // pred_check_branch
        %383 = sbr.rel (%p381) target = $region56
      $region55: #{tpu_custom_call.1} parent=5 // pred_region
        %s384 = ssub.s32 %s18, 2
        // Predicated region
        $region57: #{tpu_custom_call.1} parent=55 // pred_check
          %p385 = pneg %p157
        $region58: #{tpu_custom_call.1} parent=55 // pred_check_branch
          %387 = sbr.rel (%p385) target = $region60
        $region59: #{tpu_custom_call.1} parent=55 // pred_region
          %s388 = sand.u32 %s142, 1
          %s389 = scalar_lea.sflag [#allocation4], %s388
          %s390 = sand.u32 %s142, 1
          %s391 = smul.addr %s390, 4
          %s392 = scalar_lea.vmem [#allocation7], %s391
          %393 = dma.done %s389, 64
        $region60: #{tpu_custom_call.1} parent=55 // pred_fallthru
          _
      $region56: #{tpu_custom_call.1} parent=5 // pred_fallthru
        _
    $region6: #{tpu_custom_call.1} parent=1 // loop_footer
      %s22 = sadd.s32 1, %s18
    $region7: #{tpu_custom_call.1} parent=1 // loop_footer_branch
      %17 = sbr.rel target = $region3
    $region8: #{tpu_custom_call.1} parent=1 // loop_exit
      _
    %394 = vsyncpa [#allocation3], 1
    %s395 = scalar_lea.sflag [#allocation3], 1
    %396 = vsyncpa %s395, 1
    %397 = vsyncpa [#allocation6], 1
    %398 = vsyncpa [#allocation4], 1
    %s399 = scalar_lea.sflag [#allocation4], 1
    %400 = vsyncpa %s399, 1

</llo_original>
